<compile_context>
chip_gen: v6e
topology: v6e:2x2x1
jax: 0.10.0
libtpu: 0.0.40
codegen_flags: <defaults>
</compile_context>

<pallas_src>
import jax
import jax.numpy as jnp
from jax.experimental import pallas as pl
from jax.experimental.pallas import tpu as pltpu


def _round_up(x, m):
    return (x + m - 1) // m * m


def _complex_linear_kernel(xr_ref, xi_ref, w_ref, b_ref, o_ref):
    # Two MXU pushes against static (sublane-aligned) slices of the resident
    # W_blk; f32 accumulation; single VPU bias add; lane-dense store.
    k = xr_ref.shape[-1]
    acc = jnp.dot(xr_ref[...], w_ref[:k, :], preferred_element_type=jnp.float32)
    acc = acc + jnp.dot(xi_ref[...], w_ref[k:, :], preferred_element_type=jnp.float32)
    o_ref[...] = (acc + b_ref[...]).astype(o_ref.dtype)


def prepare_complex_linear_params(w_r, w_i, b_r, b_i, *, compute_dtype=jnp.float32):
    """Build the fused weight/bias slabs ONCE per weight update.

    w_*: (N, K) torch-Linear layout; b_*: (N,).
    Returns (w_blk (2K, 2N), b_blk (1, 2N)).
    """
    N, K = w_r.shape
    wr_t = w_r.T.astype(compute_dtype)                 # (K, N)
    wi_t = w_i.T.astype(compute_dtype)                 # (K, N)
    w_blk = jnp.concatenate(
        [jnp.concatenate([wr_t, wi_t], axis=1),        # [ Wr^T  Wi^T]
         jnp.concatenate([-wi_t, wr_t], axis=1)],      # [-Wi^T  Wr^T]
        axis=0)                                        # (2K, 2N)
    b_blk = jnp.concatenate([b_r - b_i, b_r + b_i]).reshape(1, 2 * N)
    return w_blk, b_blk.astype(jnp.float32)


def _choose_tm(M, tm_max=512):
    # Aim for >= 2 grid steps when M allows (v7x megacore + pipelining),
    # rows-per-step always a multiple of 8 (or the full M when M <= 8).
    if M <= 8:
        return M
    return max(8, min(_round_up(tm_max, 8), _round_up(pl.cdiv(M, 2), 8)))


def complex_linear_fused(x_r, x_i, w_blk, b_blk, *, tm_max=512, out_dtype=None):
    """Fused complex Linear. Returns the lane-dense (M, 2N) slab [out_r|out_i]."""
    M, K = x_r.shape
    twoK, twoN = w_blk.shape
    assert twoK == 2 * K and x_i.shape == (M, K)
    N = twoN // 2

    if out_dtype is None:
        out_dtype = x_r.dtype
    compute_dtype = w_blk.dtype
    if x_r.dtype != compute_dtype:
        # Ideally upstream already emits activations in compute_dtype.
        x_r = x_r.astype(compute_dtype)
        x_i = x_i.astype(compute_dtype)

    tm = _choose_tm(M, tm_max)
    grid_m = pl.cdiv(M, tm)

    in_bytes = jnp.dtype(compute_dtype).itemsize
    out_bytes = jnp.dtype(out_dtype).itemsize

    # Actual VMEM footprint (double-buffered tiles + resident weight/bias),
    # with 2x headroom -- well under 1 MiB at gnnModel sizes.
    vmem_need = (2 * 2 * tm * K * in_bytes            # x_r, x_i tiles (2 bufs each)
                 + 2 * tm * twoN * out_bytes          # output tile (2 bufs)
                 + 2 * twoK * twoN * in_bytes         # W_blk
                 + 2 * 8 * 128 * 4)                   # bias tile (padded)
    vmem_limit = int(min(max(2 * vmem_need, 1 << 20), 32 << 20))

    cost = pl.CostEstimate(
        flops=2 * M * twoK * twoN,
        transcendentals=0,
        bytes_accessed=(2 * M * K * in_bytes + twoK * twoN * in_bytes
                        + twoN * 4 + M * twoN * out_bytes),
    )

    out = pl.pallas_call(
        _complex_linear_kernel,
        out_shape=jax.ShapeDtypeStruct((M, twoN), out_dtype),
        grid_spec=pltpu.PrefetchScalarGridSpec(
            num_scalar_prefetch=0,
            grid=(grid_m,),
            in_specs=[
                pl.BlockSpec((tm, K), lambda i: (i, 0)),        # x_r tile
                pl.BlockSpec((tm, K), lambda i: (i, 0)),        # x_i tile
                pl.BlockSpec((twoK, twoN), lambda i: (0, 0)),   # W_blk (resident)
                pl.BlockSpec((1, twoN), lambda i: (0, 0)),      # bias (resident)
            ],
            out_specs=pl.BlockSpec((tm, twoN), lambda i: (i, 0)),
        ),
        compiler_params=pltpu.CompilerParams(
            dimension_semantics=("parallel",),   # shards M across TCs on v7x
            vmem_limit_bytes=vmem_limit,
        ),
        cost_estimate=cost,
    )(x_r, x_i, w_blk, b_blk)
    return out


def complex_linear(x_r, x_i, w_r, w_i, b_r, b_i, *, tm_max=512):
    """Convenience wrapper (prepares params per call and splits the slab).

    Prefer prepare_complex_linear_params + complex_linear_fused in a hot path
    and consume the fused (M, 2N) layout downstream.
    """
    N = w_r.shape[0]
    w_blk, b_blk = prepare_complex_linear_params(w_r, w_i, b_r, b_i,
                                                 compute_dtype=x_r.dtype)
    out = complex_linear_fused(x_r, x_i, w_blk, b_blk, tm_max=tm_max)
    return out[:, :N], out[:, N:]


if __name__ == "__main__":
    # Sizes consistent with gnnModel's GNN: in = gnn hidden 32, out = 64.
    batch = 100          # deliberately not a multiple of 8 -> ragged last block
    in_features = 32
    out_features = 64

    key = jax.random.PRNGKey(0)
    k_xr, k_xi, k_wr, k_wi, k_br, k_bi = jax.random.split(key, 6)

    x_r = jax.random.normal(k_xr, (batch, in_features), dtype=jnp.float32)
    x_i = jax.random.normal(k_xi, (batch, in_features), dtype=jnp.float32)

    bound = 1.0 / jnp.sqrt(jnp.float32(in_features))
    w_r = jax.random.uniform(k_wr, (out_features, in_features),
                             minval=-bound, maxval=bound, dtype=jnp.float32)
    w_i = jax.random.uniform(k_wi, (out_features, in_features),
                             minval=-bound, maxval=bound, dtype=jnp.float32)
    b_r = jax.random.uniform(k_br, (out_features,),
                             minval=-bound, maxval=bound, dtype=jnp.float32)
    b_i = jax.random.uniform(k_bi, (out_features,),
                             minval=-bound, maxval=bound, dtype=jnp.float32)

    # Pure-JAX reference (exactly the PyTorch ComplexLinear forward).
    ref_r = (x_r @ w_r.T + b_r) - (x_i @ w_i.T + b_i)
    ref_i = (x_i @ w_r.T + b_r) + (x_r @ w_i.T + b_i)
    ref_fused = jnp.concatenate([ref_r, ref_i], axis=1)

    # --- f32 path: params prepared once, fused (M, 2N) output ---------------
    w_blk, b_blk = prepare_complex_linear_params(w_r, w_i, b_r, b_i)
    out = complex_linear_fused(x_r, x_i, w_blk, b_blk)
    jax.block_until_ready(out)
    assert out.shape == (batch, 2 * out_features)
    assert jnp.allclose(out, ref_fused, atol=1e-5, rtol=1e-5)

    # --- bf16 inputs / f32 accumulation (v6e/v7x friendly) ------------------
    w_blk16, b_blk16 = prepare_complex_linear_params(
        w_r, w_i, b_r, b_i, compute_dtype=jnp.bfloat16)
    out16 = complex_linear_fused(x_r.astype(jnp.bfloat16),
                                 x_i.astype(jnp.bfloat16),
                                 w_blk16, b_blk16, out_dtype=jnp.float32)
    jax.block_until_ready(out16)
    assert jnp.allclose(out16, ref_fused, atol=8e-2, rtol=0.0)

    # --- convenience split wrapper ------------------------------------------
    out_r, out_i = complex_linear(x_r, x_i, w_r, w_i, b_r, b_i)
    jax.block_until_ready((out_r, out_i))
    assert jnp.allclose(out_r, ref_r, atol=1e-5, rtol=1e-5)
    assert jnp.allclose(out_i, ref_i, atol=1e-5, rtol=1e-5)

    print("KERNEL_OK")
</pallas_src>

<mosaic_0001>
module attributes {stable_mosaic.version = 11 : i64} {
  func.func @_complex_linear_kernel(%arg0: i32, %arg1: memref<56x32xf32, #tpu.memory_space<vmem>>, %arg2: memref<56x32xf32, #tpu.memory_space<vmem>>, %arg3: memref<64x128xf32, #tpu.memory_space<vmem>>, %arg4: memref<1x128xf32, #tpu.memory_space<vmem>>, %arg5: memref<56x128xf32, #tpu.memory_space<vmem>>) attributes {dimension_semantics = [#tpu.dimension_semantics<parallel>], iteration_bounds = array<i64: 2>, scalar_prefetch = 0 : i64, scratch_operands = 0 : i64, tpu.core_type = #tpu.core_type<tc>, window_params = [{transform_indices = @transform_0, window_bounds = array<i64: 56, 32>}, {transform_indices = @transform_1, window_bounds = array<i64: 56, 32>}, {pipeline_mode = #tpu.pipeline_mode<synchronous>, transform_indices = @transform_2, window_bounds = array<i64: 64, 128>}, {pipeline_mode = #tpu.pipeline_mode<synchronous>, transform_indices = @transform_3, window_bounds = array<i64: 1, 128>}, {transform_indices = @transform_4, window_bounds = array<i64: 56, 128>}]} {
    %c0 = arith.constant 0 : index
    %c0_0 = arith.constant 0 : index
    %0 = vector.load %arg1[%c0, %c0_0] : memref<56x32xf32, #tpu.memory_space<vmem>>, vector<56x32xf32>
    %c0_1 = arith.constant 0 : index
    %c0_2 = arith.constant 0 : index
    %1 = vector.load %arg3[%c0_1, %c0_2] : memref<64x128xf32, #tpu.memory_space<vmem>>, vector<32x128xf32>
    %cst = arith.constant dense<0.000000e+00> : vector<56x128xf32>
    %2 = tpu.matmul %0, %1, %cst {dimension_numbers = #tpu.dot_dimension_numbers<[1], [0], [0], [1], [0, 0, 1, 1], [], []>} : vector<56x32xf32>, vector<32x128xf32>, vector<56x128xf32> -> vector<56x128xf32>
    %c0_3 = arith.constant 0 : index
    %c0_4 = arith.constant 0 : index
    %3 = vector.load %arg2[%c0_3, %c0_4] : memref<56x32xf32, #tpu.memory_space<vmem>>, vector<56x32xf32>
    %c32 = arith.constant 32 : index
    %c0_5 = arith.constant 0 : index
    %4 = vector.load %arg3[%c32, %c0_5] : memref<64x128xf32, #tpu.memory_space<vmem>>, vector<32x128xf32>
    %cst_6 = arith.constant dense<0.000000e+00> : vector<56x128xf32>
    %5 = tpu.matmul %3, %4, %cst_6 {dimension_numbers = #tpu.dot_dimension_numbers<[1], [0], [0], [1], [0, 0, 1, 1], [], []>} : vector<56x32xf32>, vector<32x128xf32>, vector<56x128xf32> -> vector<56x128xf32>
    %6 = arith.addf %2, %5 : vector<56x128xf32>
    %c0_7 = arith.constant 0 : index
    %c0_8 = arith.constant 0 : index
    %7 = vector.load %arg4[%c0_7, %c0_8] : memref<1x128xf32, #tpu.memory_space<vmem>>, vector<1x128xf32>
    %8 = vector.broadcast %7 : vector<1x128xf32> to vector<56x128xf32>
    %9 = arith.addf %6, %8 : vector<56x128xf32>
    %c0_9 = arith.constant 0 : index
    %c0_10 = arith.constant 0 : index
    %10 = vector.load %arg5[%c0_9, %c0_10] : memref<56x128xf32, #tpu.memory_space<vmem>>, vector<56x128xf32>
    tpu.vector_store %arg5[%c0_9, %c0_10], %9 {strides = array<i32>} : memref<56x128xf32, #tpu.memory_space<vmem>>, vector<56x128xf32>,
    return
  }
  func.func @transform_0(%arg0: i32) -> (i32, i32) {
    %c0_i32 = arith.constant 0 : i32
    %c0_i32_0 = arith.constant 0 : i32
    return %arg0, %c0_i32 : i32, i32
  }
  func.func @transform_1(%arg0: i32) -> (i32, i32) {
    %c0_i32 = arith.constant 0 : i32
    %c0_i32_0 = arith.constant 0 : i32
    return %arg0, %c0_i32 : i32, i32
  }
  func.func @transform_2(%arg0: i32) -> (i32, i32) {
    %c0_i32 = arith.constant 0 : i32
    %c0_i32_0 = arith.constant 0 : i32
    %c0_i32_1 = arith.constant 0 : i32
    return %c0_i32, %c0_i32_0 : i32, i32
  }
  func.func @transform_3(%arg0: i32) -> (i32, i32) {
    %c0_i32 = arith.constant 0 : i32
    %c0_i32_0 = arith.constant 0 : i32
    %c0_i32_1 = arith.constant 0 : i32
    return %c0_i32, %c0_i32_0 : i32, i32
  }
  func.func @transform_4(%arg0: i32) -> (i32, i32) {
    %c0_i32 = arith.constant 0 : i32
    %c0_i32_0 = arith.constant 0 : i32
    return %arg0, %c0_i32 : i32, i32
  }
}

</mosaic_0001>

<llo_original>
// kernel: tpu_custom_call.1
$region0: #{tpu_custom_call.1}
  #allocation0 [shape = 'u32[]', space=smem, size = 0x4, offset = 0x4, fixed_abs, tag = 'smem constant byte address 0x4 - core index']
  #allocation1 [shape = 'u32[144,128]{1,0:T(1,128)}', space=vmem, size = 0x12000, scoped, tag = 'internal scratch']
  %s0 = inlined_call_operand.vmem [shape: f32[100,32], index: 0, kind: input, shape index: {}]
  %s1 = inlined_call_operand.vmem [shape: f32[100,32], index: 1, kind: input, shape index: {}]
  %s2 = inlined_call_operand.vmem [shape: f32[64,128], index: 2, kind: input, shape index: {}]
  %s3 = inlined_call_operand.vmem [shape: f32[1,128], index: 3, kind: input, shape index: {}]
  %s4 = inlined_call_operand.hbm [shape: f32[100,128], index: 4, kind: output, shape index: {}]
  %s5 = sld [smem:[#allocation0]]
  $region49: #{tpu_custom_call.1} parent=0
    _
  %s7 = ssub.s32 1, %s5
  %s8 = scalar_select 0, %s7, %s5
  $region1: #{tpu_custom_call.1} parent=0
    #allocation2 [shape = 'u8[57344]{0}', space=vmem, size = 0xe000, scoped, tag = 'output window, operand 0']
    #allocation3 [shape = 's32[2]{0}', space=sflag, size = 0x8, scoped, tag = 'scoped memory for tpu_custom_call.1']
    %9 = vsyncpa [#allocation3], 0
    %s10 = scalar_lea.sflag [#allocation3], 1
    %11 = vsyncpa %s10, 0
    loop: start=0, step=1, limit=4
    $region2: #{tpu_custom_call.1} parent=1 // loop_pre_header
      _
    $region3: #{tpu_custom_call.1} parent=1 // loop_header
      %s13 = sphi 0, %s17
      %p14 = scmp.ge.s32.totalorder %s13, 4
      %s23 = sphi 0, %s25
      %s26 = sphi 0, %s23
      %s27 = sphi 0, %s26
      %s43 = sphi 0, %s27
      %s49 = sphi 0, %s51
      %s52 = sphi 0, %s49
      %s53 = sphi 0, %s52
      %s69 = sphi 0, %s53
      %s73 = sphi 0, %s73
      %s75 = sphi 0, %s73
      %s76 = sphi 0, %s75
      %s90 = sphi 0, %s76
      %s94 = sphi 0, %s94
      %s96 = sphi 0, %s94
      %s97 = sphi 0, %s96
      %s111 = sphi 0, %s97
      %s117 = sphi 0, %s119
      %s120 = sphi 0, %s117
      %s121 = sphi 0, %s120
      %s137 = sphi 0, %s121
    $region4: #{tpu_custom_call.1} parent=1 // loop_header_branch
      %16 = sbr.rel (%p14) target = $region8
    $region5: #{tpu_custom_call.1} parent=1 // loop_body
      %s18 = ssub.s32 %s13, 1
      %s19 = ssub.s32 %s13, 2
      %s20 = sadd.s32 %s13, 1
      %s21 = ssub.s32 %s13, %s20
      %p22 = scmp.eq.s32.totalorder %s21, 0
      %s24 = sadd.s32 %s23, 1
      %s25 = scalar_select %p22, %s23, %s24
      %p28 = pneg %p22
      %p29 = scmp.eq.s32.totalorder %s13, 1
      %p30 = por %p28, %p29
      %p31 = scmp.ne.s32.totalorder %s23, %s26
      %p32 = scmp.eq.s32.totalorder %s13, 0
      %p33 = por %p31, %p32
      %p34 = scmp.ne.s32.totalorder %s23, %s26
      %p35 = scmp.eq.s32.totalorder %s18, 1
      %p36 = por %p34, %p35
      %p37 = scmp.ne.s32.totalorder %s26, %s27
      %p38 = scmp.eq.s32.totalorder %s18, 0
      %p39 = por %p37, %p38
      %p40 = scmp.ne.s32.totalorder %s26, %s27
      %p41 = scmp.eq.s32.totalorder %s19, 1
      %p42 = por %p40, %p41
      %p44 = scmp.ne.s32.totalorder %s27, %s43
      %p45 = scmp.eq.s32.totalorder %s19, 0
      %p46 = por %p44, %p45
      %s47 = ssub.s32 %s13, %s20
      %p48 = scmp.eq.s32.totalorder %s47, 0
      %s50 = sadd.s32 %s49, 1
      %s51 = scalar_select %p48, %s49, %s50
      %p54 = pneg %p48
      %p55 = scmp.eq.s32.totalorder %s13, 1
      %p56 = por %p54, %p55
      %p57 = scmp.ne.s32.totalorder %s49, %s52
      %p58 = scmp.eq.s32.totalorder %s13, 0
      %p59 = por %p57, %p58
      %p60 = scmp.ne.s32.totalorder %s49, %s52
      %p61 = scmp.eq.s32.totalorder %s18, 1
      %p62 = por %p60, %p61
      %p63 = scmp.ne.s32.totalorder %s52, %s53
      %p64 = scmp.eq.s32.totalorder %s18, 0
      %p65 = por %p63, %p64
      %p66 = scmp.ne.s32.totalorder %s52, %s53
      %p67 = scmp.eq.s32.totalorder %s19, 1
      %p68 = por %p66, %p67
      %p70 = scmp.ne.s32.totalorder %s53, %s69
      %p71 = scmp.eq.s32.totalorder %s19, 0
      %p72 = por %p70, %p71
      %s74 = sadd.s32 %s73, 1
      %p77 = scmp.eq.s32.totalorder %s13, 1
      %p78 = scmp.ne.s32.totalorder %s73, %s75
      %p79 = scmp.eq.s32.totalorder %s13, 0
      %p80 = por %p78, %p79
      %p81 = scmp.ne.s32.totalorder %s73, %s75
      %p82 = scmp.eq.s32.totalorder %s18, 1
      %p83 = por %p81, %p82
      %p84 = scmp.ne.s32.totalorder %s75, %s76
      %p85 = scmp.eq.s32.totalorder %s18, 0
      %p86 = por %p84, %p85
      %p87 = scmp.ne.s32.totalorder %s75, %s76
      %p88 = scmp.eq.s32.totalorder %s19, 1
      %p89 = por %p87, %p88
      %p91 = scmp.ne.s32.totalorder %s76, %s90
      %p92 = scmp.eq.s32.totalorder %s19, 0
      %p93 = por %p91, %p92
      %s95 = sadd.s32 %s94, 1
      %p98 = scmp.eq.s32.totalorder %s13, 1
      %p99 = scmp.ne.s32.totalorder %s94, %s96
      %p100 = scmp.eq.s32.totalorder %s13, 0
      %p101 = por %p99, %p100
      %p102 = scmp.ne.s32.totalorder %s94, %s96
      %p103 = scmp.eq.s32.totalorder %s18, 1
      %p104 = por %p102, %p103
      %p105 = scmp.ne.s32.totalorder %s96, %s97
      %p106 = scmp.eq.s32.totalorder %s18, 0
      %p107 = por %p105, %p106
      %p108 = scmp.ne.s32.totalorder %s96, %s97
      %p109 = scmp.eq.s32.totalorder %s19, 1
      %p110 = por %p108, %p109
      %p112 = scmp.ne.s32.totalorder %s97, %s111
      %p113 = scmp.eq.s32.totalorder %s19, 0
      %p114 = por %p112, %p113
      %s115 = ssub.s32 %s13, %s20
      %p116 = scmp.eq.s32.totalorder %s115, 0
      %s118 = sadd.s32 %s117, 1
      %s119 = scalar_select %p116, %s117, %s118
      %p122 = pneg %p116
      %p123 = scmp.eq.s32.totalorder %s13, 1
      %p124 = por %p122, %p123
      %p125 = scmp.ne.s32.totalorder %s117, %s120
      %p126 = scmp.eq.s32.totalorder %s13, 0
      %p127 = por %p125, %p126
      %p128 = scmp.ne.s32.totalorder %s117, %s120
      %p129 = scmp.eq.s32.totalorder %s18, 1
      %p130 = por %p128, %p129
      %p131 = scmp.ne.s32.totalorder %s120, %s121
      %p132 = scmp.eq.s32.totalorder %s18, 0
      %p133 = por %p131, %p132
      %p134 = scmp.ne.s32.totalorder %s120, %s121
      %p135 = scmp.eq.s32.totalorder %s19, 1
      %p136 = por %p134, %p135
      %p138 = scmp.ne.s32.totalorder %s121, %s137
      %p139 = scmp.eq.s32.totalorder %s19, 0
      %p140 = por %p138, %p139
      %p141 = scmp.le.s32.totalorder 1, %s13
      %p142 = scmp.lt.s32.totalorder %s13, 3
      %p143 = pnand %p141, %p142
      %p144 = pneg %p143
      // Predicated region
      $region9: #{tpu_custom_call.1} parent=5 // pred_check
        _
      $region10: #{tpu_custom_call.1} parent=5 // pred_check_branch
        %146 = sbr.rel (%p143) target = $region12
      $region11: #{tpu_custom_call.1} parent=5 // pred_region
        %s147 = ssub.s32 %s13, 1
        // Predicated region
        $region13: #{tpu_custom_call.1} parent=11 // pred_check
          %p148 = pneg %p86
        $region14: #{tpu_custom_call.1} parent=11 // pred_check_branch
          %150 = sbr.rel (%p148) target = $region16
        $region15: #{tpu_custom_call.1} parent=11 // pred_region
          _
        $region16: #{tpu_custom_call.1} parent=11 // pred_fallthru
          _
        // Predicated region
        $region17: #{tpu_custom_call.1} parent=11 // pred_check
          %p151 = pneg %p107
        $region18: #{tpu_custom_call.1} parent=11 // pred_check_branch
          %153 = sbr.rel (%p151) target = $region20
        $region19: #{tpu_custom_call.1} parent=11 // pred_region
          _
        $region20: #{tpu_custom_call.1} parent=11 // pred_fallthru
          _
      $region12: #{tpu_custom_call.1} parent=5 // pred_fallthru
        _
      %p154 = scmp.lt.s32.totalorder %s13, 2
      // Predicated region
      $region21: #{tpu_custom_call.1} parent=5 // pred_check
        %p155 = pneg %p154
      $region22: #{tpu_custom_call.1} parent=5 // pred_check_branch
        %157 = sbr.rel (%p155) target = $region24
      $region23: #{tpu_custom_call.1} parent=5 // pred_region
        // Predicated region
        $region25: #{tpu_custom_call.1} parent=23 // pred_check
          %p158 = pneg %p33
        $region26: #{tpu_custom_call.1} parent=23 // pred_check_branch
          %160 = sbr.rel (%p158) target = $region28
        $region27: #{tpu_custom_call.1} parent=23 // pred_region
          %s161 = smul.u32 7, %s13
          %s162 = ssub.s32 13, %s161
          %p163 = scmp.lt.s32.totalorder %s162, 7
          %s164 = scalar_select %p163, %s162, 7
          %s165 = smul.u32 128, %s164
          %p166 = scmp.lt.s32.totalorder %s161, 12
          %s167 = scalar_select %p166, %s161, 12
          %s168 = smul.addr %s167, 8
          %s169 = scalar_lea.vmem %s0, %s168
          %s170 = smul.u32 7, %s13
          %s171 = ssub.s32 13, %s170
          %p172 = scmp.lt.s32.totalorder %s171, 7
          %s173 = scalar_select %p172, %s171, 7
          %s174 = smul.u32 128, %s173
        $region28: #{tpu_custom_call.1} parent=23 // pred_fallthru
          _
        // Predicated region
        $region29: #{tpu_custom_call.1} parent=23 // pred_check
          %p175 = pneg %p59
        $region30: #{tpu_custom_call.1} parent=23 // pred_check_branch
          %177 = sbr.rel (%p175) target = $region32
        $region31: #{tpu_custom_call.1} parent=23 // pred_region
          %s178 = smul.u32 7, %s13
          %s179 = ssub.s32 13, %s178
          %p180 = scmp.lt.s32.totalorder %s179, 7
          %s181 = scalar_select %p180, %s179, 7
          %s182 = smul.u32 128, %s181
          %p183 = scmp.lt.s32.totalorder %s178, 12
          %s184 = scalar_select %p183, %s178, 12
          %s185 = smul.addr %s184, 8
          %s186 = scalar_lea.vmem %s1, %s185
          %s187 = smul.u32 7, %s13
          %s188 = ssub.s32 13, %s187
          %p189 = scmp.lt.s32.totalorder %s188, 7
          %s190 = scalar_select %p189, %s188, 7
          %s191 = smul.u32 128, %s190
        $region32: #{tpu_custom_call.1} parent=23 // pred_fallthru
          _
      $region24: #{tpu_custom_call.1} parent=5 // pred_fallthru
        _
      %p192 = scmp.le.s32.totalorder 1, %s13
      %p193 = scmp.lt.s32.totalorder %s13, 3
      %p194 = pnand %p192, %p193
      %p195 = pneg %p194
      // Predicated region
      $region33: #{tpu_custom_call.1} parent=5 // pred_check
        _
      $region34: #{tpu_custom_call.1} parent=5 // pred_check_branch
        %197 = sbr.rel (%p194) target = $region36
      $region35: #{tpu_custom_call.1} parent=5 // pred_region
        %s198 = ssub.s32 %s13, 1
        %s199 = smul.u32 7, %s18
        %s200 = ssub.s32 13, %s199
        %p201 = scmp.lt.s32.totalorder %s200, 7
        %s202 = scalar_select %p201, %s200, 7
        %s203 = smul.u32 128, %s202
        %p204 = scmp.lt.s32.totalorder %s199, 12
        %s205 = scalar_select %p204, %s199, 12
        %s206 = smul.addr %s205, 8
        %s207 = scalar_lea.vmem %s0, %s206
        %p208 = pneg %p39
        %p209 = pneg %p36
        %s210 = smul.u32 7, %s18
        %s211 = ssub.s32 13, %s210
        %p212 = scmp.lt.s32.totalorder %s211, 7
        %s213 = scalar_select %p212, %s211, 7
        %s214 = smul.u32 128, %s213
        %p215 = scmp.lt.s32.totalorder %s210, 12
        %s216 = scalar_select %p215, %s210, 12
        %s217 = smul.addr %s216, 8
        %s218 = scalar_lea.vmem %s1, %s217
        %p219 = pneg %p65
        %p220 = pneg %p62
        %p221 = pneg %p86
        %p222 = pneg %p83
        %p223 = pneg %p107
        %p224 = pneg %p104
        %p225 = pneg %p133
        %p226 = pneg %p130
        %s227 = sand.u32 %s120, 1
        %s228 = scalar_lea.sflag [#allocation3], %s227
        %s229 = sand.u32 %s120, 1
        %s230 = smul.addr %s229, 56
        %s231 = scalar_lea.vmem [#allocation2], %s230
        %s232 = smul.u32 7, %s18
        %s233 = ssub.s32 13, %s232
        %p234 = scmp.lt.s32.totalorder %s233, 7
        %s235 = scalar_select %p234, %s233, 7
        %s236 = smul.u32 128, %s235
        %p237 = scmp.lt.s32.totalorder %s232, 12
        %s238 = scalar_select %p237, %s232, 12
        %s239 = smul.addr %s238, 8
        %s240 = scalar_lea.vmem %s0, %s239
        %s241 = smul.u32 7, %s18
        %s242 = ssub.s32 13, %s241
        %p243 = scmp.lt.s32.totalorder %s242, 7
        %s244 = scalar_select %p243, %s242, 7
        %s245 = smul.u32 128, %s244
        %s246 = smul.u32 7, %s18
        %s247 = ssub.s32 13, %s246
        %p248 = scmp.lt.s32.totalorder %s247, 7
        %s249 = scalar_select %p248, %s247, 7
        %s250 = smul.u32 128, %s249
        %p251 = scmp.lt.s32.totalorder %s246, 12
        %s252 = scalar_select %p251, %s246, 12
        %s253 = smul.addr %s252, 8
        %s254 = scalar_lea.vmem %s1, %s253
        %s255 = smul.u32 7, %s18
        %s256 = ssub.s32 13, %s255
        %p257 = scmp.lt.s32.totalorder %s256, 7
        %s258 = scalar_select %p257, %s256, 7
        %s259 = smul.u32 128, %s258
        %s260 = smul.u32 7, %s18
        %s261 = ssub.s32 13, %s260
        %p262 = scmp.lt.s32.totalorder %s261, 7
        %s263 = scalar_select %p262, %s261, 7
        %s264 = smul.u32 128, %s263
        %v265 = vld [vmem:[%s240] sm:$0xff]
        %v266 = vld [vmem:[%s240 + $0x8] sm:$0xff]
        %v267 = vld [vmem:[%s240 + $0x10] sm:$0xff]
        %v268 = vld [vmem:[%s240 + $0x18] sm:$0xff]
        %v269 = vld [vmem:[%s240 + $0x20] sm:$0xff]
        %v270 = vld [vmem:[%s240 + $0x28] sm:$0xff]
        %v271 = vld [vmem:[%s240 + $0x30] sm:$0xff]
        %v272 = vld [vmem:[%s2] sm:$0xff]
        %v273 = vld [vmem:[%s2 + $0x8] sm:$0xff]
        %v274 = vld [vmem:[%s2 + $0x10] sm:$0xff]
        %v275 = vld [vmem:[%s2 + $0x18] sm:$0xff]
        %v276 = vld [vmem:[%s254] sm:$0xff]
        %v277 = vld [vmem:[%s254 + $0x8] sm:$0xff]
        %v278 = vld [vmem:[%s254 + $0x10] sm:$0xff]
        %v279 = vld [vmem:[%s254 + $0x18] sm:$0xff]
        %v280 = vld [vmem:[%s254 + $0x20] sm:$0xff]
        %v281 = vld [vmem:[%s254 + $0x28] sm:$0xff]
        %v282 = vld [vmem:[%s254 + $0x30] sm:$0xff]
        %v283 = vld [vmem:[%s2 + $0x20] sm:$0xff]
        %v284 = vld [vmem:[%s2 + $0x28] sm:$0xff]
        %v285 = vld [vmem:[%s2 + $0x30] sm:$0xff]
        %v286 = vld [vmem:[%s2 + $0x38] sm:$0xff]
        %vm287 = vcmask 261120
        %v289 = vsel %vm287, %v276, 0
        %v292 = vsel %vm287, %v277, 0
        %v295 = vsel %vm287, %v278, 0
        %v298 = vsel %vm287, %v279, 0
        %v301 = vsel %vm287, %v280, 0
        %v304 = vsel %vm287, %v281, 0
        %v307 = vsel %vm287, %v282, 0
        %309 = vmatprep.subr.mxu0 0.0
        %310 = vmatpush1.msra.mxu0 0.0
        %311 = vmatprep.subr.mxu0 0.0
        %312 = vmatpush1.msra.mxu0 0.0
        %313 = vmatprep.subr.mxu0 0.0
        %314 = vmatpush1.msra.mxu0 0.0
        %315 = vmatprep.subr.mxu0 0.0
        %316 = vmatpush1.msra.mxu0 0.0
        %317 = vmatprep.subr.mxu0 0.0
        %318 = vmatpush1.msra.mxu0 0.0
        %319 = vmatprep.subr.mxu0 0.0
        %320 = vmatpush1.msra.mxu0 0.0
        %321 = vmatprep.subr.mxu0 0.0
        %322 = vmatpush1.msra.mxu0 0.0
        %323 = vmatprep.subr.mxu0 0.0
        %324 = vmatpush1.msra.mxu0 0.0
        %325 = vmatprep.subr.mxu0 0.0
        %326 = vmatpush1.msra.mxu0 0.0
        %327 = vmatprep.subr.mxu0 0.0
        %328 = vmatpush1.msra.mxu0 0.0
        %329 = vmatprep.subr.mxu0 0.0
        %330 = vmatpush1.msra.mxu0 0.0
        %331 = vmatprep.subr.mxu0 0.0
        %332 = vmatpush1.msra.mxu0 0.0
        %333 = vmatprep.subr.mxu0 0.0
        %334 = vmatpush1.msra.mxu0 %v286
        %335 = vmatprep.subr.mxu0 0.0
        %336 = vmatpush1.msra.mxu0 %v285
        %337 = vmatprep.subr.mxu0 0.0
        %338 = vmatpush1.msra.mxu0 %v284
        %339 = vmatprep.subr.mxu0 0.0
        %340 = vmatpush1.msra.mxu0 %v283
        %341 = vmatprep.subr.mxu0 0.0
        %342 = vmatpush2.msra.mxu0 0.0
        %343 = vmatprep.subr.mxu0 0.0
        %344 = vmatpush2.msra.mxu0 0.0
        %345 = vmatprep.subr.mxu0 0.0
        %346 = vmatpush2.msra.mxu0 0.0
        %347 = vmatprep.subr.mxu0 0.0
        %348 = vmatpush2.msra.mxu0 0.0
        %349 = vmatprep.subr.mxu0 0.0
        %350 = vmatpush2.msra.mxu0 0.0
        %351 = vmatprep.subr.mxu0 0.0
        %352 = vmatpush2.msra.mxu0 0.0
        %353 = vmatprep.subr.mxu0 0.0
        %354 = vmatpush2.msra.mxu0 0.0
        %355 = vmatprep.subr.mxu0 0.0
        %356 = vmatpush2.msra.mxu0 0.0
        %357 = vmatprep.subr.mxu0 0.0
        %358 = vmatpush2.msra.mxu0 0.0
        %359 = vmatprep.subr.mxu0 0.0
        %360 = vmatpush2.msra.mxu0 0.0
        %361 = vmatprep.subr.mxu0 0.0
        %362 = vmatpush2.msra.mxu0 0.0
        %363 = vmatprep.subr.mxu0 0.0
        %364 = vmatpush2.msra.mxu0 0.0
        %365 = vmatprep.subr.mxu0 0.0
        %366 = vmatpush2.msra.mxu0 0.0
        %367 = vmatprep.subr.mxu0 0.0
        %368 = vmatpush2.msra.mxu0 0.0
        %369 = vmatprep.subr.mxu0 0.0
        %370 = vmatpush2.msra.mxu0 0.0
        %371 = vmatprep.subr.mxu0 0.0
        %372 = vmatpush2.msra.mxu0 0.0
        %373 = vmatprep.mubr.f32.mxu0 0.0
        %374 = vmatmul.mubr.f32.gmra.mxu0 %v289
        %v375 = vpop.f32.mrf.mxu0
        %v376 = vadd.f32 0.0, %v375
        %v377 = vpop.f32.mrf.mxu0
        %378 = vmatprep.mubr.f32.mxu0 0.0
        %379 = vmatmul.mubr.f32.gmra.mxu0 %v292
        %v380 = vpop.f32.mrf.mxu0
        %v381 = vadd.f32 0.0, %v380
        %v382 = vpop.f32.mrf.mxu0
        %383 = vmatprep.mubr.f32.mxu0 0.0
        %384 = vmatmul.mubr.f32.gmra.mxu0 %v295
        %v385 = vpop.f32.mrf.mxu0
        %v386 = vadd.f32 0.0, %v385
        %v387 = vpop.f32.mrf.mxu0
        %388 = vmatprep.mubr.f32.mxu0 0.0
        %389 = vmatmul.mubr.f32.gmra.mxu0 %v298
        %v390 = vpop.f32.mrf.mxu0
        %v391 = vadd.f32 0.0, %v390
        %v392 = vpop.f32.mrf.mxu0
        %393 = vmatprep.mubr.f32.mxu0 0.0
        %394 = vmatmul.mubr.f32.gmra.mxu0 %v301
        %v395 = vpop.f32.mrf.mxu0
        %v396 = vadd.f32 0.0, %v395
        %v397 = vpop.f32.mrf.mxu0
        %398 = vmatprep.mubr.f32.mxu0 0.0
        %399 = vmatmul.mubr.f32.gmra.mxu0 %v304
        %v400 = vpop.f32.mrf.mxu0
        %v401 = vadd.f32 0.0, %v400
        %v402 = vpop.f32.mrf.mxu0
        %403 = vmatprep.mubr.f32.mxu0 0.0
        %404 = vmatmul.mubr.f32.gmra.mxu0 %v307
        %v405 = vpop.f32.mrf.mxu0
        %v406 = vadd.f32 0.0, %v405
        %v407 = vpop.f32.mrf.mxu0
        %408 = vdwg.mxu0
        %v410 = vsel %vm287, %v265, 0
        %v413 = vsel %vm287, %v266, 0
        %v416 = vsel %vm287, %v267, 0
        %v419 = vsel %vm287, %v268, 0
        %v422 = vsel %vm287, %v269, 0
        %v425 = vsel %vm287, %v270, 0
        %v428 = vsel %vm287, %v271, 0
        %430 = vmatprep.subr.mxu0 0.0
        %431 = vmatpush1.msra.mxu0 0.0
        %432 = vmatprep.subr.mxu0 0.0
        %433 = vmatpush1.msra.mxu0 0.0
        %434 = vmatprep.subr.mxu0 0.0
        %435 = vmatpush1.msra.mxu0 0.0
        %436 = vmatprep.subr.mxu0 0.0
        %437 = vmatpush1.msra.mxu0 0.0
        %438 = vmatprep.subr.mxu0 0.0
        %439 = vmatpush1.msra.mxu0 0.0
        %440 = vmatprep.subr.mxu0 0.0
        %441 = vmatpush1.msra.mxu0 0.0
        %442 = vmatprep.subr.mxu0 0.0
        %443 = vmatpush1.msra.mxu0 0.0
        %444 = vmatprep.subr.mxu0 0.0
        %445 = vmatpush1.msra.mxu0 0.0
        %446 = vmatprep.subr.mxu0 0.0
        %447 = vmatpush1.msra.mxu0 0.0
        %448 = vmatprep.subr.mxu0 0.0
        %449 = vmatpush1.msra.mxu0 0.0
        %450 = vmatprep.subr.mxu0 0.0
        %451 = vmatpush1.msra.mxu0 0.0
        %452 = vmatprep.subr.mxu0 0.0
        %453 = vmatpush1.msra.mxu0 0.0
        %454 = vmatprep.subr.mxu0 0.0
        %455 = vmatpush1.msra.mxu0 %v275
        %456 = vmatprep.subr.mxu0 0.0
        %457 = vmatpush1.msra.mxu0 %v274
        %458 = vmatprep.subr.mxu0 0.0
        %459 = vmatpush1.msra.mxu0 %v273
        %460 = vmatprep.subr.mxu0 0.0
        %461 = vmatpush1.msra.mxu0 %v272
        %462 = vmatprep.subr.mxu0 0.0
        %463 = vmatpush2.msra.mxu0 0.0
        %464 = vmatprep.subr.mxu0 0.0
        %465 = vmatpush2.msra.mxu0 0.0
        %466 = vmatprep.subr.mxu0 0.0
        %467 = vmatpush2.msra.mxu0 0.0
        %468 = vmatprep.subr.mxu0 0.0
        %469 = vmatpush2.msra.mxu0 0.0
        %470 = vmatprep.subr.mxu0 0.0
        %471 = vmatpush2.msra.mxu0 0.0
        %472 = vmatprep.subr.mxu0 0.0
        %473 = vmatpush2.msra.mxu0 0.0
        %474 = vmatprep.subr.mxu0 0.0
        %475 = vmatpush2.msra.mxu0 0.0
        %476 = vmatprep.subr.mxu0 0.0
        %477 = vmatpush2.msra.mxu0 0.0
        %478 = vmatprep.subr.mxu0 0.0
        %479 = vmatpush2.msra.mxu0 0.0
        %480 = vmatprep.subr.mxu0 0.0
        %481 = vmatpush2.msra.mxu0 0.0
        %482 = vmatprep.subr.mxu0 0.0
        %483 = vmatpush2.msra.mxu0 0.0
        %484 = vmatprep.subr.mxu0 0.0
        %485 = vmatpush2.msra.mxu0 0.0
        %486 = vmatprep.subr.mxu0 0.0
        %487 = vmatpush2.msra.mxu0 0.0
        %488 = vmatprep.subr.mxu0 0.0
        %489 = vmatpush2.msra.mxu0 0.0
        %490 = vmatprep.subr.mxu0 0.0
        %491 = vmatpush2.msra.mxu0 0.0
        %492 = vmatprep.subr.mxu0 0.0
        %493 = vmatpush2.msra.mxu0 0.0
        %494 = vmatprep.mubr.f32.mxu0 0.0
        %495 = vmatmul.mubr.f32.gmra.mxu0 %v410
        %v496 = vpop.f32.mrf.mxu0
        %v497 = vadd.f32 %v376, %v496
        %v498 = vpop.f32.mrf.mxu0
        %499 = vmatprep.mubr.f32.mxu0 0.0
        %500 = vmatmul.mubr.f32.gmra.mxu0 %v413
        %v501 = vpop.f32.mrf.mxu0
        %v502 = vadd.f32 %v381, %v501
        %v503 = vpop.f32.mrf.mxu0
        %504 = vmatprep.mubr.f32.mxu0 0.0
        %505 = vmatmul.mubr.f32.gmra.mxu0 %v416
        %v506 = vpop.f32.mrf.mxu0
        %v507 = vadd.f32 %v386, %v506
        %v508 = vpop.f32.mrf.mxu0
        %509 = vmatprep.mubr.f32.mxu0 0.0
        %510 = vmatmul.mubr.f32.gmra.mxu0 %v419
        %v511 = vpop.f32.mrf.mxu0
        %v512 = vadd.f32 %v391, %v511
        %v513 = vpop.f32.mrf.mxu0
        %514 = vmatprep.mubr.f32.mxu0 0.0
        %515 = vmatmul.mubr.f32.gmra.mxu0 %v422
        %v516 = vpop.f32.mrf.mxu0
        %v517 = vadd.f32 %v396, %v516
        %v518 = vpop.f32.mrf.mxu0
        %519 = vmatprep.mubr.f32.mxu0 0.0
        %520 = vmatmul.mubr.f32.gmra.mxu0 %v425
        %v521 = vpop.f32.mrf.mxu0
        %v522 = vadd.f32 %v401, %v521
        %v523 = vpop.f32.mrf.mxu0
        %524 = vmatprep.mubr.f32.mxu0 0.0
        %525 = vmatmul.mubr.f32.gmra.mxu0 %v428
        %v526 = vpop.f32.mrf.mxu0
        %v527 = vadd.f32 %v406, %v526
        %v528 = vpop.f32.mrf.mxu0
        %529 = vdwg.mxu0
        %v530 = vld [vmem:[%s3] sm:$0x1]
        %v532 = vlaneseq
        %v533 = vshrl.u32 %v532, 7
        %v534 = vsub.s32 0, %v533
        %v535 = vrot.slane %v530, %v534
        %v537 = vadd.f32 %v497, %v535
        %v538 = vadd.f32 %v502, %v535
        %v539 = vadd.f32 %v507, %v535
        %v540 = vadd.f32 %v512, %v535
        %v541 = vadd.f32 %v517, %v535
        %v542 = vadd.f32 %v522, %v535
        %v543 = vadd.f32 %v527, %v535
        %544 = vst [vmem:[%s231] sm:$0xff] %v537
        %545 = vst [vmem:[%s231 + $0x8] sm:$0xff] %v538
        %546 = vst [vmem:[%s231 + $0x10] sm:$0xff] %v539
        %547 = vst [vmem:[%s231 + $0x18] sm:$0xff] %v540
        %548 = vst [vmem:[%s231 + $0x20] sm:$0xff] %v541
        %549 = vst [vmem:[%s231 + $0x28] sm:$0xff] %v542
        %550 = vst [vmem:[%s231 + $0x30] sm:$0xff] %v543
        %s551 = sand.u32 %s120, 1
        %s552 = scalar_lea.sflag [#allocation3], %s551
        %s553 = sand.u32 %s120, 1
        %s554 = smul.addr %s553, 56
        %s555 = scalar_lea.vmem [#allocation2], %s554
        // Predicated region
        $region37: #{tpu_custom_call.1} parent=35 // pred_check
          %p556 = pneg %p130
        $region38: #{tpu_custom_call.1} parent=35 // pred_check_branch
          %558 = sbr.rel (%p556) target = $region40
        $region39: #{tpu_custom_call.1} parent=35 // pred_region
          %s559 = smul.u32 7, %s18
          %s560 = ssub.s32 13, %s559
          %p561 = scmp.lt.s32.totalorder %s560, 7
          %s562 = scalar_select %p561, %s560, 7
          %s563 = smul.u32 128, %s562
          %s565 = ssub.s32 896, %s563
          %566 = vsyncadd %s552, %s565
          %p567 = scmp.ne.s32.totalorder 0, %s563
          %s568 = smul.addr %s559, 128
          %s569 = scalar_lea.hbm %s4, %s568
          %s570 = smul.u32 8, %s562
          %s571 = sshll.u32 %s555, 4
          %s572 = int_to_ptr.vmem [resolvable:$true] %s571
          %s573 = sshll.u32 %s570, 4
          %577 = dma.vmem_to_hbm [thread:$0]  (%p567), %s572, %s573, %s569, %s552, 128, 128, 8
        $region40: #{tpu_custom_call.1} parent=35 // pred_fallthru
          _
      $region36: #{tpu_custom_call.1} parent=5 // pred_fallthru
        _
      %p578 = scmp.le.s32.totalorder 2, %s13
      // Predicated region
      $region41: #{tpu_custom_call.1} parent=5 // pred_check
        %p579 = pneg %p578
      $region42: #{tpu_custom_call.1} parent=5 // pred_check_branch
        %581 = sbr.rel (%p579) target = $region44
      $region43: #{tpu_custom_call.1} parent=5 // pred_region
        %s582 = ssub.s32 %s13, 2
        // Predicated region
        $region45: #{tpu_custom_call.1} parent=43 // pred_check
          %p583 = pneg %p136
        $region46: #{tpu_custom_call.1} parent=43 // pred_check_branch
          %585 = sbr.rel (%p583) target = $region48
        $region47: #{tpu_custom_call.1} parent=43 // pred_region
          %s586 = sand.u32 %s121, 1
          %s587 = scalar_lea.sflag [#allocation3], %s586
          %s588 = sand.u32 %s121, 1
          %s589 = smul.addr %s588, 56
          %s590 = scalar_lea.vmem [#allocation2], %s589
          %591 = dma.done %s587, 896
        $region48: #{tpu_custom_call.1} parent=43 // pred_fallthru
          _
      $region44: #{tpu_custom_call.1} parent=5 // pred_fallthru
        _
    $region6: #{tpu_custom_call.1} parent=1 // loop_footer
      %s17 = sadd.s32 1, %s13
    $region7: #{tpu_custom_call.1} parent=1 // loop_footer_branch
      %12 = sbr.rel target = $region3
    $region8: #{tpu_custom_call.1} parent=1 // loop_exit
      _
    %592 = vsyncpa [#allocation3], 1
    %s593 = scalar_lea.sflag [#allocation3], 1
    %594 = vsyncpa %s593, 1

</llo_original>
